<compile_context>
chip_gen: v7x
topology: tpu7x:2x2x1
jax: 0.10.0
libtpu: 0.0.40
codegen_flags: <defaults>
</compile_context>

<pallas_src>
import functools

import jax
import jax.numpy as jnp
from jax.experimental import pallas as pl
from jax.experimental.pallas import tpu as pltpu


def _sgm_kernel(seg_ref, feat_ref, out_ref, m_ref, denom_ref, acc_ref, *,
                scale, hw_actual):
    # seg_ref  : (K, HWp)  resident across spatial steps (padded tail is zeros)
    # feat_ref : (C, THW)  streamed spatial tile, native dtype
    # out_ref  : (K, C)    lane-dense output block
    # m_ref    : (K, 1)    f32 softmax shift (row max)
    # denom_ref: (K, 1)    f32 softmax denominator accumulator
    # acc_ref  : (K, C)    f32 accumulator of exp(logits) @ feat
    si = pl.program_id(1)
    n_si = pl.num_programs(1)
    t_hw = feat_ref.shape[-1]
    hw_pad = seg_ref.shape[-1]
    ragged = hw_actual != hw_pad          # static

    @pl.when(si == 0)
    def _():
        seg = seg_ref[...].astype(jnp.float32)
        if scale != 1.0:                  # statically skipped when scale == 1
            seg = seg * scale
        # Padded tail of seg is zero; including it in the max only raises the
        # shift, which stays exact because it cancels in the final division.
        m_ref[...] = jnp.max(seg, axis=-1, keepdims=True)
        denom_ref[...] = jnp.zeros_like(denom_ref)
        acc_ref[...] = jnp.zeros_like(acc_ref)

    if t_hw == hw_pad:                    # single spatial step
        seg_t = seg_ref[...]
    else:
        start = pl.multiple_of(si * t_hw, t_hw)
        seg_t = seg_ref[:, pl.ds(start, t_hw)]
    seg_t = seg_t.astype(jnp.float32)
    if scale != 1.0:
        seg_t = seg_t * scale
    e_t = jnp.exp(seg_t - m_ref[...])     # (K, THW) unnormalized probabilities

    feat = feat_ref[...]                  # (C, THW) native dtype
    if ragged:
        # Mask the tail columns of the last (partial) spatial tile. feat's tail
        # is an out-of-bounds read (arbitrary bits), so it must be zeroed too.
        col = si * t_hw + jax.lax.broadcasted_iota(jnp.int32, (1, t_hw), 1)
        valid = col < hw_actual
        e_t = jnp.where(valid, e_t, 0.0)
        feat = jnp.where(valid, feat, jnp.zeros((), feat.dtype))

    denom_ref[...] += jnp.sum(e_t, axis=-1, keepdims=True)
    # (K, THW) x (C, THW) contracting the spatial dim -> lane-dense (K, C).
    acc_ref[...] += jax.lax.dot_general(
        e_t.astype(feat.dtype), feat,
        dimension_numbers=(((1,), (1,)), ((), ())),
        preferred_element_type=jnp.float32)

    @pl.when(si == n_si - 1)
    def _():
        # Exact f32 normalization applied once to the small (K, C) accumulator.
        out_ref[...] = (acc_ref[...] / denom_ref[...]).astype(out_ref.dtype)


def _auto_tile_hw(hw, c, itemsize, target_bytes=8 << 20):
    """Full HW if small; else a 128-multiple sized so one feat buffer is about
    target_bytes (double-buffered by the pipeline -> ~2x in VMEM; safe on
    v5e/v6e/v7x). v6e users with huge C can pass a larger target."""
    if hw <= 1024:
        return hw
    lanes = (target_bytes // max(1, c * itemsize)) // 128 * 128
    lanes = max(512, lanes)
    return min(lanes, pl.cdiv(hw, 128) * 128)


def sgm_forward(features, seg_logit, *, scale=1.0, tile_hw=None):
    """features: (B, C, H, W), seg_logit: (B, K, H, W) -> (B, C, K, 1)."""
    b, c, h, w = features.shape
    k = seg_logit.shape[1]
    hw = h * w

    feat = features.reshape(b, c, hw)    # (B, C, HW) -- no HBM transpose, no pad
    seg = seg_logit.reshape(b, k, hw)    # (B, K, HW)

    if tile_hw is None:
        tile_hw = _auto_tile_hw(hw, c, feat.dtype.itemsize)
    tile_hw = int(tile_hw)
    if tile_hw >= hw:
        tile_hw = hw                      # single full-extent spatial block
    elif tile_hw % 128 != 0:
        tile_hw = pl.cdiv(tile_hw, 128) * 128   # multi-step tiles: lane-aligned
    hw_pad = pl.cdiv(hw, tile_hw) * tile_hw
    n_hw = hw_pad // tile_hw

    # Pad ONLY seg (tiny: B*K*HW). feat, the dominant tensor, is never copied in
    # HBM; its ragged last tile is masked inside the kernel.
    if hw_pad != hw:
        seg = jnp.pad(seg, ((0, 0), (0, 0), (0, hw_pad - hw)))

    # Explicit scoped-VMEM budget with headroom; capped at 48 MiB (v7x-safe).
    vmem_need = (2 * c * tile_hw * feat.dtype.itemsize     # feat double buffer
                 + 2 * k * hw_pad * seg.dtype.itemsize     # resident seg (x2)
                 + 2 * k * c * features.dtype.itemsize     # out block (x2)
                 + k * c * 4 + 2 * 8 * 128 * 4)            # f32 scratch (padded)
    vmem_limit = max(16 << 20, min(int(vmem_need) + (8 << 20), 48 << 20))

    kernel = functools.partial(_sgm_kernel, scale=float(scale), hw_actual=hw)

    out_kc = pl.pallas_call(
        kernel,
        out_shape=jax.ShapeDtypeStruct((b, k, c), features.dtype),
        grid_spec=pltpu.PrefetchScalarGridSpec(
            num_scalar_prefetch=0,
            grid=(b, n_hw),
            in_specs=[
                pl.BlockSpec((None, k, hw_pad), lambda bi, si: (bi, 0, 0)),    # seg, resident
                pl.BlockSpec((None, c, tile_hw), lambda bi, si: (bi, 0, si)),  # feat, streamed
            ],
            out_specs=pl.BlockSpec((None, k, c), lambda bi, si: (bi, 0, 0)),
            scratch_shapes=[
                pltpu.VMEM((k, 1), jnp.float32),   # softmax shift m
                pltpu.VMEM((k, 1), jnp.float32),   # softmax denominator
                pltpu.VMEM((k, c), jnp.float32),   # f32 (K, C) accumulator
            ],
        ),
        compiler_params=pltpu.CompilerParams(
            dimension_semantics=("parallel", "arbitrary"),
            vmem_limit_bytes=vmem_limit,
        ),
    )(seg, feat)

    # glue: (B, K, C) -> (B, C, K, 1)  (tiny tensor; endorsed by the perf review)
    return jnp.transpose(out_kc, (0, 2, 1))[..., None]


def _sgm_reference(features, seg_logit, *, scale=1.0):
    b, c, h, w = features.shape
    k = seg_logit.shape[1]
    seg = seg_logit.reshape(b, k, h * w)
    feat = jnp.transpose(features.reshape(b, c, h * w), (0, 2, 1))
    p = jax.nn.softmax(scale * seg, axis=2)
    out = jnp.einsum("bks,bsc->bkc", p, feat, precision="highest")
    return jnp.transpose(out, (0, 2, 1))[..., None]


if __name__ == "__main__":
    key = jax.random.PRNGKey(0)
    k1, k2, k3, k4 = jax.random.split(key, 4)

    # Tolerance note: the reference matmul runs at precision='highest'; the
    # kernel's f32 MXU contraction may use reduced-precision passes depending on
    # generation/backend, so a few-1e-3 absolute slack is required. Structural
    # bugs (indexing/masking/accumulation) produce errors orders of magnitude
    # larger and are still caught.
    ATOL = RTOL = 5e-3

    # Case 1: HW = 256 streamed as 2 tiles (accumulator path, non-ragged).
    B, C, H, W, K = 2, 32, 16, 16, 2
    features = jax.random.normal(k1, (B, C, H, W), dtype=jnp.float32)
    seg_logit = jax.random.normal(k2, (B, K, H, W), dtype=jnp.float32)
    out = jax.block_until_ready(
        sgm_forward(features, seg_logit, scale=1.0, tile_hw=128))
    ref = _sgm_reference(features, seg_logit, scale=1.0)
    assert out.shape == (B, C, K, 1), out.shape
    assert jnp.allclose(out, ref, atol=ATOL, rtol=RTOL), "case 1 mismatch vs reference"

    # Case 2: HW = 169 -> ragged last tile (in-kernel masking) + scale != 1.
    B2, C2, H2, W2, K2 = 2, 16, 13, 13, 3
    features2 = jax.random.normal(k3, (B2, C2, H2, W2), dtype=jnp.float32)
    seg_logit2 = jax.random.normal(k4, (B2, K2, H2, W2), dtype=jnp.float32)
    out2 = jax.block_until_ready(
        sgm_forward(features2, seg_logit2, scale=2.0, tile_hw=128))
    ref2 = _sgm_reference(features2, seg_logit2, scale=2.0)
    assert out2.shape == (B2, C2, K2, 1), out2.shape
    assert jnp.allclose(out2, ref2, atol=ATOL, rtol=RTOL), "case 2 mismatch vs reference"

    # Case 3: default (auto) tiling -> single full-extent spatial block.
    out3 = jax.block_until_ready(sgm_forward(features, seg_logit, scale=1.0))
    assert out3.shape == (B, C, K, 1), out3.shape
    assert jnp.allclose(out3, ref, atol=ATOL, rtol=RTOL), "case 3 mismatch vs reference"

    print("KERNEL_OK")
</pallas_src>

<mosaic_0001>
module attributes {stable_mosaic.version = 11 : i64} {
  func.func @_sgm_kernel(%arg0: i32, %arg1: i32, %arg2: memref<1x2x256xf32, #tpu.memory_space<vmem>>, %arg3: memref<1x32x128xf32, #tpu.memory_space<vmem>>, %arg4: memref<1x2x32xf32, #tpu.memory_space<vmem>>, %arg5: memref<2x1xf32, #tpu.memory_space<vmem>>, %arg6: memref<2x1xf32, #tpu.memory_space<vmem>>, %arg7: memref<2x32xf32, #tpu.memory_space<vmem>>) attributes {dimension_semantics = [#tpu.dimension_semantics<parallel>, #tpu.dimension_semantics<arbitrary>], iteration_bounds = array<i64: 2, 2>, scalar_prefetch = 0 : i64, scratch_operands = 3 : i64, tpu.core_type = #tpu.core_type<tc>, window_params = [{transform_indices = @transform_0, window_bounds = array<i64: 1, 2, 256>}, {transform_indices = @transform_1, window_bounds = array<i64: 1, 32, 128>}, {transform_indices = @transform_2, window_bounds = array<i64: 1, 2, 32>}]} {
    %c0_i32 = arith.constant 0 : i32
    %0 = arith.cmpi eq, %arg1, %c0_i32 : i32
    %1 = arith.extui %0 : i1 to i32
    %c0_i32_0 = arith.constant 0 : i32
    %2 = arith.cmpi ne, %1, %c0_i32_0 : i32
    scf.if %2 {
      %c0_17 = arith.constant 0 : index
      %c0_18 = arith.constant 0 : index
      %c0_19 = arith.constant 0 : index
      %26 = vector.load %arg2[%c0_17, %c0_18, %c0_19] : memref<1x2x256xf32, #tpu.memory_space<vmem>>, vector<1x2x256xf32>
      %27 = vector.shape_cast %26 : vector<1x2x256xf32> to vector<2x256xf32>
      %cst_20 = arith.constant dense<0xFF800000> : vector<2xf32>
      %28 = vector.multi_reduction <maximumf>, %27, %cst_20 [1] : vector<2x256xf32> to vector<2xf32>
      %29 = vector.shape_cast %28 : vector<2xf32> to vector<2x1xf32>
      %c0_21 = arith.constant 0 : index
      %c0_22 = arith.constant 0 : index
      %30 = vector.load %arg5[%c0_21, %c0_22] : memref<2x1xf32, #tpu.memory_space<vmem>>, vector<2x1xf32>
      tpu.vector_store %arg5[%c0_21, %c0_22], %29 {strides = array<i32>} : memref<2x1xf32, #tpu.memory_space<vmem>>, vector<2x1xf32>,
      %cst_23 = arith.constant 0.000000e+00 : f32
      %31 = vector.broadcast %cst_23 : f32 to vector<2x1xf32>
      %c0_24 = arith.constant 0 : index
      %c0_25 = arith.constant 0 : index
      %32 = vector.load %arg6[%c0_24, %c0_25] : memref<2x1xf32, #tpu.memory_space<vmem>>, vector<2x1xf32>
      tpu.vector_store %arg6[%c0_24, %c0_25], %31 {strides = array<i32>} : memref<2x1xf32, #tpu.memory_space<vmem>>, vector<2x1xf32>,
      %cst_26 = arith.constant 0.000000e+00 : f32
      %33 = vector.broadcast %cst_26 : f32 to vector<2x32xf32>
      %c0_27 = arith.constant 0 : index
      %c0_28 = arith.constant 0 : index
      %34 = vector.load %arg7[%c0_27, %c0_28] : memref<2x32xf32, #tpu.memory_space<vmem>>, vector<2x32xf32>
      tpu.vector_store %arg7[%c0_27, %c0_28], %33 {strides = array<i32>} : memref<2x32xf32, #tpu.memory_space<vmem>>, vector<2x32xf32>,
    } else {
    }
    %c128_i32 = arith.constant 128 : i32
    %3 = arith.muli %arg1, %c128_i32 : i32
    %4 = tpu.assume_multiple %3, 128 : i32
    %c0 = arith.constant 0 : index
    %c0_1 = arith.constant 0 : index
    %5 = arith.index_cast %4 : i32 to index
    %6 = vector.load %arg2[%c0, %c0_1, %5] : memref<1x2x256xf32, #tpu.memory_space<vmem>>, vector<1x2x128xf32>
    %7 = vector.shape_cast %6 : vector<1x2x128xf32> to vector<2x128xf32>
    %c0_2 = arith.constant 0 : index
    %c0_3 = arith.constant 0 : index
    %8 = vector.load %arg5[%c0_2, %c0_3] : memref<2x1xf32, #tpu.memory_space<vmem>>, vector<2x1xf32>
    %9 = vector.broadcast %8 : vector<2x1xf32> to vector<2x128xf32>
    %10 = arith.subf %7, %9 : vector<2x128xf32>
    %11 = math.exp %10 : vector<2x128xf32>
    %c0_4 = arith.constant 0 : index
    %c0_5 = arith.constant 0 : index
    %c0_6 = arith.constant 0 : index
    %12 = vector.load %arg3[%c0_4, %c0_5, %c0_6] : memref<1x32x128xf32, #tpu.memory_space<vmem>>, vector<1x32x128xf32>
    %13 = vector.shape_cast %12 : vector<1x32x128xf32> to vector<32x128xf32>
    %c0_7 = arith.constant 0 : index
    %c0_8 = arith.constant 0 : index
    %14 = vector.load %arg6[%c0_7, %c0_8] : memref<2x1xf32, #tpu.memory_space<vmem>>, vector<2x1xf32>
    %cst = arith.constant dense<0.000000e+00> : vector<2xf32>
    %15 = vector.multi_reduction <add>, %11, %cst [1] : vector<2x128xf32> to vector<2xf32>
    %16 = vector.shape_cast %15 : vector<2xf32> to vector<2x1xf32>
    %17 = arith.addf %14, %16 : vector<2x1xf32>
    %c0_9 = arith.constant 0 : index
    %c0_10 = arith.constant 0 : index
    %18 = vector.load %arg6[%c0_9, %c0_10] : memref<2x1xf32, #tpu.memory_space<vmem>>, vector<2x1xf32>
    tpu.vector_store %arg6[%c0_9, %c0_10], %17 {strides = array<i32>} : memref<2x1xf32, #tpu.memory_space<vmem>>, vector<2x1xf32>,
    %c0_11 = arith.constant 0 : index
    %c0_12 = arith.constant 0 : index
    %19 = vector.load %arg7[%c0_11, %c0_12] : memref<2x32xf32, #tpu.memory_space<vmem>>, vector<2x32xf32>
    %cst_13 = arith.constant dense<0.000000e+00> : vector<2x32xf32>
    %20 = tpu.matmul %11, %13, %cst_13 {dimension_numbers = #tpu.dot_dimension_numbers<[1], [1], [0], [0], [0, 0, 1, 0], [], []>} : vector<2x128xf32>, vector<32x128xf32>, vector<2x32xf32> -> vector<2x32xf32>
    %21 = arith.addf %19, %20 : vector<2x32xf32>
    %c0_14 = arith.constant 0 : index
    %c0_15 = arith.constant 0 : index
    %22 = vector.load %arg7[%c0_14, %c0_15] : memref<2x32xf32, #tpu.memory_space<vmem>>, vector<2x32xf32>
    tpu.vector_store %arg7[%c0_14, %c0_15], %21 {strides = array<i32>} : memref<2x32xf32, #tpu.memory_space<vmem>>, vector<2x32xf32>,
    %c1_i32 = arith.constant 1 : i32
    %23 = arith.cmpi eq, %arg1, %c1_i32 : i32
    %24 = arith.extui %23 : i1 to i32
    %c0_i32_16 = arith.constant 0 : i32
    %25 = arith.cmpi ne, %24, %c0_i32_16 : i32
    scf.if %25 {
      %c0_17 = arith.constant 0 : index
      %c0_18 = arith.constant 0 : index
      %26 = vector.load %arg7[%c0_17, %c0_18] : memref<2x32xf32, #tpu.memory_space<vmem>>, vector<2x32xf32>
      %c0_19 = arith.constant 0 : index
      %c0_20 = arith.constant 0 : index
      %27 = vector.load %arg6[%c0_19, %c0_20] : memref<2x1xf32, #tpu.memory_space<vmem>>, vector<2x1xf32>
      %28 = vector.broadcast %27 : vector<2x1xf32> to vector<2x32xf32>
      %29 = arith.divf %26, %28 : vector<2x32xf32>
      %c0_21 = arith.constant 0 : index
      %c0_22 = arith.constant 0 : index
      %c0_23 = arith.constant 0 : index
      %30 = vector.load %arg4[%c0_21, %c0_22, %c0_23] : memref<1x2x32xf32, #tpu.memory_space<vmem>>, vector<1x2x32xf32>
      %31 = vector.shape_cast %30 : vector<1x2x32xf32> to vector<2x32xf32>
      %32 = vector.shape_cast %29 : vector<2x32xf32> to vector<1x2x32xf32>
      tpu.vector_store %arg4[%c0_21, %c0_22, %c0_23], %32 {strides = array<i32>} : memref<1x2x32xf32, #tpu.memory_space<vmem>>, vector<1x2x32xf32>,
    } else {
    }
    return
  }
  func.func @transform_0(%arg0: i32, %arg1: i32) -> (i32, i32, i32) {
    %c0_i32 = arith.constant 0 : i32
    %c0_i32_0 = arith.constant 0 : i32
    %c0_i32_1 = arith.constant 0 : i32
    return %arg0, %c0_i32, %c0_i32_0 : i32, i32, i32
  }
  func.func @transform_1(%arg0: i32, %arg1: i32) -> (i32, i32, i32) {
    %c0_i32 = arith.constant 0 : i32
    %c0_i32_0 = arith.constant 0 : i32
    return %arg0, %c0_i32, %arg1 : i32, i32, i32
  }
  func.func @transform_2(%arg0: i32, %arg1: i32) -> (i32, i32, i32) {
    %c0_i32 = arith.constant 0 : i32
    %c0_i32_0 = arith.constant 0 : i32
    %c0_i32_1 = arith.constant 0 : i32
    return %arg0, %c0_i32, %c0_i32_0 : i32, i32, i32
  }
}

</mosaic_0001>

<llo_original>
// kernel: tpu_custom_call.1
$region0: #{tpu_custom_call.1}
  #allocation0 [shape = 'u32[]', space=smem, size = 0x4, offset = 0x4, fixed_abs, tag = 'smem constant byte address 0x4 - core index']
  #allocation1 [shape = 'u32[144,128]{1,0:T(1,128)}', space=vmem, size = 0x12000, scoped, tag = 'internal scratch']
  #allocation2 [shape = 'f32[2,1]{1,0:T(2,128)}', space=vmem, size = 0x400, scoped, tag = 'scratch operand']
  #allocation3 [shape = 'f32[2,1]{1,0:T(2,128)}', space=vmem, size = 0x400, scoped, tag = 'scratch operand']
  #allocation4 [shape = 'f32[2,32]{1,0:T(2,128)}', space=vmem, size = 0x400, scoped, tag = 'scratch operand']
  %s0 = inlined_call_operand.hbm [shape: f32[2,2,256], index: 0, kind: input, shape index: {}]
  %s1 = inlined_call_operand.hbm [shape: f32[2,32,256], index: 1, kind: input, shape index: {}]
  %s2 = inlined_call_operand.hbm [shape: f32[2,2,32], index: 2, kind: output, shape index: {}]
  %s3 = sld [smem:[#allocation0]]
  $region57: #{tpu_custom_call.1} parent=0
    _
  %s5 = ssub.s32 1, %s3
  %s6 = scalar_select 0, %s5, %s3
  $region1: #{tpu_custom_call.1} parent=0
    #allocation5 [shape = 'u8[4096]{0}', space=vmem, size = 0x1000, scoped, tag = 'input window, operand 0']
    #allocation6 [shape = 's32[2]{0}', space=sflag, size = 0x8, scoped, tag = 'scoped memory for tpu_custom_call.1']
    #allocation7 [shape = 's32[2]{0}', space=sflag, size = 0x8, scoped, tag = 'scoped memory for tpu_custom_call.1']
    #allocation8 [shape = 'u8[32768]{0}', space=vmem, size = 0x8000, scoped, tag = 'input window, operand 1']
    #allocation9 [shape = 's32[2]{0}', space=sflag, size = 0x8, scoped, tag = 'scoped memory for tpu_custom_call.1']
    #allocation10 [shape = 'u8[2048]{0}', space=vmem, size = 0x800, scoped, tag = 'output window, operand 0']
    %7 = vsyncpa [#allocation6], 0
    %s8 = scalar_lea.sflag [#allocation6], 1
    %9 = vsyncpa %s8, 0
    %10 = vsyncpa [#allocation9], 0
    %s11 = scalar_lea.sflag [#allocation9], 1
    %12 = vsyncpa %s11, 0
    %13 = vsyncpa [#allocation7], 0
    %s14 = scalar_lea.sflag [#allocation7], 1
    %15 = vsyncpa %s14, 0
    loop: start=0, step=1, limit=6
    $region2: #{tpu_custom_call.1} parent=1 // loop_pre_header
      _
    $region3: #{tpu_custom_call.1} parent=1 // loop_header
      %s17 = sphi 0, %s21
      %p18 = scmp.ge.s32.totalorder %s17, 6
      %s24 = sphi 0, %s36
      %s25 = sphi 0, %s32
      %s26 = sphi 0, %s24
      %s27 = sphi 0, %s25
      %s28 = sphi 0, %s26
      %s29 = sphi 0, %s27
      %s39 = sphi 0, %s41
      %s42 = sphi 0, %s39
      %s43 = sphi 0, %s42
      %s59 = sphi 0, %s43
      %s67 = sphi 0, %s69
      %s70 = sphi 0, %s67
      %s71 = sphi 0, %s70
      %s87 = sphi 0, %s71
      %s93 = sphi 0, %s95
      %s96 = sphi 0, %s93
      %s97 = sphi 0, %s96
      %s113 = sphi 0, %s97
    $region4: #{tpu_custom_call.1} parent=1 // loop_header_branch
      %20 = sbr.rel (%p18) target = $region8
    $region5: #{tpu_custom_call.1} parent=1 // loop_body
      %s22 = ssub.s32 %s17, 1
      %s23 = ssub.s32 %s17, 2
      %s30 = sadd.s32 1, %s25
      %p31 = scmp.ge.s32.totalorder %s30, 2
      %s32 = scalar_select %p31, 0, %s30
      %s33 = sadd.s32 1, %s24
      %s34 = scalar_select %p31, %s33, %s24
      %p35 = scmp.ge.s32.totalorder %s34, 2
      %s36 = scalar_select %p35, 0, %s34
      %s37 = ssub.s32 %s24, %s36
      %p38 = scmp.eq.s32.totalorder %s37, 0
      %s40 = sadd.s32 %s39, 1
      %s41 = scalar_select %p38, %s39, %s40
      %p44 = pneg %p38
      %p45 = scmp.eq.s32.totalorder %s17, 3
      %p46 = por %p44, %p45
      %p47 = scmp.ne.s32.totalorder %s39, %s42
      %p48 = scmp.eq.s32.totalorder %s17, 0
      %p49 = por %p47, %p48
      %p50 = scmp.ne.s32.totalorder %s39, %s42
      %p51 = scmp.eq.s32.totalorder %s22, 3
      %p52 = por %p50, %p51
      %p53 = scmp.ne.s32.totalorder %s42, %s43
      %p54 = scmp.eq.s32.totalorder %s22, 0
      %p55 = por %p53, %p54
      %p56 = scmp.ne.s32.totalorder %s42, %s43
      %p57 = scmp.eq.s32.totalorder %s23, 3
      %p58 = por %p56, %p57
      %p60 = scmp.ne.s32.totalorder %s43, %s59
      %p61 = scmp.eq.s32.totalorder %s23, 0
      %p62 = por %p60, %p61
      %s63 = ssub.s32 %s24, %s36
      %s64 = ssub.s32 %s25, %s32
      %s65 = sor.u32 %s63, %s64
      %p66 = scmp.eq.s32.totalorder %s65, 0
      %s68 = sadd.s32 %s67, 1
      %s69 = scalar_select %p66, %s67, %s68
      %p72 = pneg %p66
      %p73 = scmp.eq.s32.totalorder %s17, 3
      %p74 = por %p72, %p73
      %p75 = scmp.ne.s32.totalorder %s67, %s70
      %p76 = scmp.eq.s32.totalorder %s17, 0
      %p77 = por %p75, %p76
      %p78 = scmp.ne.s32.totalorder %s67, %s70
      %p79 = scmp.eq.s32.totalorder %s22, 3
      %p80 = por %p78, %p79
      %p81 = scmp.ne.s32.totalorder %s70, %s71
      %p82 = scmp.eq.s32.totalorder %s22, 0
      %p83 = por %p81, %p82
      %p84 = scmp.ne.s32.totalorder %s70, %s71
      %p85 = scmp.eq.s32.totalorder %s23, 3
      %p86 = por %p84, %p85
      %p88 = scmp.ne.s32.totalorder %s71, %s87
      %p89 = scmp.eq.s32.totalorder %s23, 0
      %p90 = por %p88, %p89
      %s91 = ssub.s32 %s24, %s36
      %p92 = scmp.eq.s32.totalorder %s91, 0
      %s94 = sadd.s32 %s93, 1
      %s95 = scalar_select %p92, %s93, %s94
      %p98 = pneg %p92
      %p99 = scmp.eq.s32.totalorder %s17, 3
      %p100 = por %p98, %p99
      %p101 = scmp.ne.s32.totalorder %s93, %s96
      %p102 = scmp.eq.s32.totalorder %s17, 0
      %p103 = por %p101, %p102
      %p104 = scmp.ne.s32.totalorder %s93, %s96
      %p105 = scmp.eq.s32.totalorder %s22, 3
      %p106 = por %p104, %p105
      %p107 = scmp.ne.s32.totalorder %s96, %s97
      %p108 = scmp.eq.s32.totalorder %s22, 0
      %p109 = por %p107, %p108
      %p110 = scmp.ne.s32.totalorder %s96, %s97
      %p111 = scmp.eq.s32.totalorder %s23, 3
      %p112 = por %p110, %p111
      %p114 = scmp.ne.s32.totalorder %s97, %s113
      %p115 = scmp.eq.s32.totalorder %s23, 0
      %p116 = por %p114, %p115
      %p117 = scmp.le.s32.totalorder 1, %s17
      %p118 = scmp.lt.s32.totalorder %s17, 5
      %p119 = pnand %p117, %p118
      %p120 = pneg %p119
      // Predicated region
      $region9: #{tpu_custom_call.1} parent=5 // pred_check
        _
      $region10: #{tpu_custom_call.1} parent=5 // pred_check_branch
        %122 = sbr.rel (%p119) target = $region12
      $region11: #{tpu_custom_call.1} parent=5 // pred_region
        %s123 = ssub.s32 %s17, 1
      $region12: #{tpu_custom_call.1} parent=5 // pred_fallthru
        _
      %p124 = scmp.lt.s32.totalorder %s17, 4
      // Predicated region
      $region13: #{tpu_custom_call.1} parent=5 // pred_check
        %p125 = pneg %p124
      $region14: #{tpu_custom_call.1} parent=5 // pred_check_branch
        %127 = sbr.rel (%p125) target = $region16
      $region15: #{tpu_custom_call.1} parent=5 // pred_region
        // Predicated region
        $region17: #{tpu_custom_call.1} parent=15 // pred_check
          %p128 = pneg %p49
        $region18: #{tpu_custom_call.1} parent=15 // pred_check_branch
          %130 = sbr.rel (%p128) target = $region20
        $region19: #{tpu_custom_call.1} parent=15 // pred_region
          %s131 = sand.u32 %s39, 1
          %s132 = scalar_lea.sflag [#allocation6], %s131
          %s133 = sand.u32 %s39, 1
          %s134 = smul.addr %s133, 4
          %s135 = scalar_lea.vmem [#allocation5], %s134
          %s137 = ssub.s32 64, 64
          %138 = vsyncadd %s132, %s137
          %s139 = smul.addr %s24, 2
          %s140 = smul.addr %s139, 32
          %s141 = scalar_lea.hbm %s0, %s140
          %s143 = sshll.u32 %s135, 4
          %s144 = int_to_ptr.vmem [resolvable:$true] %s143
          %146 = dma.hbm_to_vmem [thread:$0]  %s141, 64, %s144, %s132
        $region20: #{tpu_custom_call.1} parent=15 // pred_fallthru
          _
        // Predicated region
        $region21: #{tpu_custom_call.1} parent=15 // pred_check
          %p147 = pneg %p77
        $region22: #{tpu_custom_call.1} parent=15 // pred_check_branch
          %149 = sbr.rel (%p147) target = $region24
        $region23: #{tpu_custom_call.1} parent=15 // pred_region
          %s150 = sand.u32 %s67, 1
          %s151 = scalar_lea.sflag [#allocation9], %s150
          %s152 = sand.u32 %s67, 1
          %s153 = smul.addr %s152, 32
          %s154 = scalar_lea.vmem [#allocation8], %s153
          %s156 = ssub.s32 512, 512
          %157 = vsyncadd %s151, %s156
          %s158 = smul.addr %s24, 8
          %s159 = sadd.s32 %s25, %s158
          %s160 = smul.addr %s159, 128
          %s161 = scalar_lea.hbm %s1, %s160
          %s162 = sshll.u32 %s154, 4
          %s163 = int_to_ptr.vmem [resolvable:$true] %s162
          %168 = dma.hbm_to_vmem [thread:$0]  %s161, 512, %s163, %s151, 256, 128, 8
        $region24: #{tpu_custom_call.1} parent=15 // pred_fallthru
          _
      $region16: #{tpu_custom_call.1} parent=5 // pred_fallthru
        _
      %p169 = scmp.le.s32.totalorder 1, %s17
      %p170 = scmp.lt.s32.totalorder %s17, 5
      %p171 = pnand %p169, %p170
      %p172 = pneg %p171
      // Predicated region
      $region25: #{tpu_custom_call.1} parent=5 // pred_check
        _
      $region26: #{tpu_custom_call.1} parent=5 // pred_check_branch
        %174 = sbr.rel (%p171) target = $region28
      $region27: #{tpu_custom_call.1} parent=5 // pred_region
        %s175 = ssub.s32 %s17, 1
        %s176 = sand.u32 %s42, 1
        %s177 = scalar_lea.sflag [#allocation6], %s176
        %s178 = sand.u32 %s42, 1
        %s179 = smul.addr %s178, 4
        %s180 = scalar_lea.vmem [#allocation5], %s179
        // Predicated region
        $region29: #{tpu_custom_call.1} parent=27 // pred_check
          %p181 = pneg %p55
        $region30: #{tpu_custom_call.1} parent=27 // pred_check_branch
          %183 = sbr.rel (%p181) target = $region32
        $region31: #{tpu_custom_call.1} parent=27 // pred_region
          %184 = dma.done %s177, 64
        $region32: #{tpu_custom_call.1} parent=27 // pred_fallthru
          _
        %s185 = sand.u32 %s70, 1
        %s186 = scalar_lea.sflag [#allocation9], %s185
        %s187 = sand.u32 %s70, 1
        %s188 = smul.addr %s187, 32
        %s189 = scalar_lea.vmem [#allocation8], %s188
        // Predicated region
        $region33: #{tpu_custom_call.1} parent=27 // pred_check
          %p190 = pneg %p83
        $region34: #{tpu_custom_call.1} parent=27 // pred_check_branch
          %192 = sbr.rel (%p190) target = $region36
        $region35: #{tpu_custom_call.1} parent=27 // pred_region
          %193 = dma.done %s186, 512
        $region36: #{tpu_custom_call.1} parent=27 // pred_fallthru
          _
        %s194 = sand.u32 %s42, 1
        %s195 = scalar_lea.sflag [#allocation6], %s194
        %s196 = sand.u32 %s42, 1
        %s197 = smul.addr %s196, 4
        %s198 = scalar_lea.vmem [#allocation5], %s197
        %p199 = pneg %p55
        %p200 = pneg %p52
        %s201 = sand.u32 %s70, 1
        %s202 = scalar_lea.sflag [#allocation9], %s201
        %s203 = sand.u32 %s70, 1
        %s204 = smul.addr %s203, 32
        %s205 = scalar_lea.vmem [#allocation8], %s204
        %p206 = pneg %p83
        %p207 = pneg %p80
        %p208 = pneg %p109
        %p209 = pneg %p106
        %s210 = sand.u32 %s96, 1
        %s211 = scalar_lea.sflag [#allocation7], %s210
        %s212 = sand.u32 %s96, 1
        %s213 = smul.addr %s212, 2
        %s214 = scalar_lea.vmem [#allocation10], %s213
        %p215 = scmp.eq.s32.totalorder %s27, 0
        // Predicated region
        $region37: #{tpu_custom_call.1} parent=27 // pred_check
          %p216 = pneg %p215
        $region38: #{tpu_custom_call.1} parent=27 // pred_check_branch
          %218 = sbr.rel (%p216) target = $region40
        $region39: #{tpu_custom_call.1} parent=27 // pred_region
          %v219 = vld [vmem:[%s180] sm:$0xf]
          %v222 = vunpack.c.l.s4 1983009808
          %v223 = vunpack.c.0.s8 %v222
          %v224 = vlaneseq
          %v225 = vshrl.u32 %v224, 7
          %v226 = vsub.s32 %v223, %v225
          %v227 = vrot.slane %v219, %v226
          %v228 = vcombine.high %v227, %v227
          %vm231 = vcmask 1041408
          %v232 = vsel %vm231, %v227, -inf
          %v233 = vsel %vm231, %v228, -inf
          %v234 = vmax.f32 %v232, %v233
          %235 = vmax.xlane.f32.xlu0 %v234
          %v236 = vpop.xlane.xlu0 %235
          %vm237 = vcmask 1024
          %238 = vst.msk [vmem:[#allocation2] sm:$0x3] %vm237, %v236
          %239 = vst.msk [vmem:[#allocation3] sm:$0x3] %vm237, 0.0
          %vm240 = vcmask 254976
          %241 = vst.msk [vmem:[#allocation4] sm:$0x3] %vm240, 0.0
        $region40: #{tpu_custom_call.1} parent=27 // pred_fallthru
          _
        %s242 = smul.u32 %s27, 128
        %s243 = sshra.s32 %s242, 7
        %s244 = sand.u32 %s242, 127
        %s245 = smul.addr %s243, 2
        %s246 = scalar_lea.vmem %s180, %s245 [#allocation5]
        %v247 = vld [vmem:[%s246] sm:$0x3]
        %v248 = vld [vmem:[#allocation2] sm:$0x3]
        %250 = vset.pattern.permute.xlu0 0
        %251 = vperm.xlu0 %250, %v248
        %v252 = vpop.permute.xlu0 %251
        %v254 = vsub.f32 %v247, %v252
        %v255 = vmul.f32 %v254, 1.442695
        %v256 = vpow.pop %v255
        %v257 = vld [vmem:[%s189] sm:$0xff]
        %v258 = vld [vmem:[%s189 + $0x8] sm:$0xff]
        %v259 = vld [vmem:[%s189 + $0x10] sm:$0xff]
        %v260 = vld [vmem:[%s189 + $0x18] sm:$0xff]
        %v261 = vld [vmem:[#allocation3] sm:$0x3]
        %vm262 = vcmask 1041408
        %v263 = vsel %vm262, %v256, 0.0
        %264 = vadd.xlane.f32.xlu0 %v263
        %v265 = vpop.xlane.xlu0 %264
        %v266 = vadd.f32 %v261, %v265
        %vm267 = vcmask 1024
        %268 = vst.msk [vmem:[#allocation3] sm:$0x3] %vm267, %v266
        %v269 = vld [vmem:[#allocation4] sm:$0x3]
        %270 = vmatprep.subr.mxu0 0.0
        %271 = vmatpush1.xpose.msra.mxu0 %v257
        %272 = vmatprep.subr.mxu0 0.0
        %273 = vmatpush1.xpose.msra.mxu0 %v258
        %274 = vmatprep.subr.mxu0 0.0
        %275 = vmatpush1.xpose.msra.mxu0 %v259
        %276 = vmatprep.subr.mxu0 0.0
        %277 = vmatpush1.xpose.msra.mxu0 %v260
        %278 = vmatprep.subr.mxu0 0.0
        %279 = vmatpush1.xpose.msra.mxu0 0.0
        %280 = vmatprep.subr.mxu0 0.0
        %281 = vmatpush1.xpose.msra.mxu0 0.0
        %282 = vmatprep.subr.mxu0 0.0
        %283 = vmatpush1.xpose.msra.mxu0 0.0
        %284 = vmatprep.subr.mxu0 0.0
        %285 = vmatpush1.xpose.msra.mxu0 0.0
        %286 = vmatprep.subr.mxu0 0.0
        %287 = vmatpush1.xpose.msra.mxu0 0.0
        %288 = vmatprep.subr.mxu0 0.0
        %289 = vmatpush1.xpose.msra.mxu0 0.0
        %290 = vmatprep.subr.mxu0 0.0
        %291 = vmatpush1.xpose.msra.mxu0 0.0
        %292 = vmatprep.subr.mxu0 0.0
        %293 = vmatpush1.xpose.msra.mxu0 0.0
        %294 = vmatprep.subr.mxu0 0.0
        %295 = vmatpush1.xpose.msra.mxu0 0.0
        %296 = vmatprep.subr.mxu0 0.0
        %297 = vmatpush1.xpose.msra.mxu0 0.0
        %298 = vmatprep.subr.mxu0 0.0
        %299 = vmatpush1.xpose.msra.mxu0 0.0
        %300 = vmatprep.subr.mxu0 0.0
        %301 = vmatpush1.xpose.msra.mxu0 0.0
        %302 = vmatprep.subr.mxu0 0.0
        %303 = vmatpush1.xpose.msra.mxu0 0.0
        %304 = vmatprep.subr.mxu0 0.0
        %305 = vmatpush1.xpose.msra.mxu0 0.0
        %306 = vmatprep.subr.mxu0 0.0
        %307 = vmatpush1.xpose.msra.mxu0 0.0
        %308 = vmatprep.subr.mxu0 0.0
        %309 = vmatpush1.xpose.msra.mxu0 0.0
        %310 = vmatprep.subr.mxu0 0.0
        %311 = vmatpush1.xpose.msra.mxu0 0.0
        %312 = vmatprep.subr.mxu0 0.0
        %313 = vmatpush1.xpose.msra.mxu0 0.0
        %314 = vmatprep.subr.mxu0 0.0
        %315 = vmatpush1.xpose.msra.mxu0 0.0
        %316 = vmatprep.subr.mxu0 0.0
        %317 = vmatpush1.xpose.msra.mxu0 0.0
        %318 = vmatprep.subr.mxu0 0.0
        %319 = vmatpush1.xpose.msra.mxu0 0.0
        %320 = vmatprep.subr.mxu0 0.0
        %321 = vmatpush1.xpose.msra.mxu0 0.0
        %322 = vmatprep.subr.mxu0 0.0
        %323 = vmatpush1.xpose.msra.mxu0 0.0
        %324 = vmatprep.subr.mxu0 0.0
        %325 = vmatpush1.xpose.msra.mxu0 0.0
        %326 = vmatprep.subr.mxu0 0.0
        %327 = vmatpush1.xpose.msra.mxu0 0.0
        %328 = vmatprep.subr.mxu0 0.0
        %329 = vmatpush1.xpose.msra.mxu0 0.0
        %330 = vmatprep.subr.mxu0 0.0
        %331 = vmatpush1.xpose.msra.mxu0 0.0
        %332 = vmatprep.subr.mxu0 0.0
        %333 = vmatpush1.xpose.msra.mxu0 0.0
        %334 = vmatprep.mubr.f32.mxu0 0.0
        %335 = vmatmul.mubr.f32.gmra.mrb[0].mxu0 %v256
        %v336 = vpop.f32.mrb[0].mxu0
        %v337 = vadd.f32 0.0, %v336
        %v338 = vpop.f32.mrb[0].mxu0
        %339 = vdwg.mxu0
        %v340 = vadd.f32 %v269, %v337
        %vm341 = vcmask 254976
        %342 = vst.msk [vmem:[#allocation4] sm:$0x3] %vm341, %v340
        %p343 = scmp.eq.s32.totalorder %s27, 1
        // Predicated region
        $region41: #{tpu_custom_call.1} parent=27 // pred_check
          %p344 = pneg %p343
        $region42: #{tpu_custom_call.1} parent=27 // pred_check_branch
          %346 = sbr.rel (%p344) target = $region44
        $region43: #{tpu_custom_call.1} parent=27 // pred_region
          %v347 = vld [vmem:[#allocation4] sm:$0x3]
          %v348 = vld [vmem:[#allocation3] sm:$0x3]
          %350 = vset.pattern.permute.xlu0 0
          %351 = vperm.xlu0 %350, %v348
          %v352 = vpop.permute.xlu0 %351
          %v354 = vrcp.pop %v352
          %v355 = vmul.f32 %v347, %v354
          %356 = vst.msk [vmem:[%s214] sm:$0x3] %vm341, %v355
        $region44: #{tpu_custom_call.1} parent=27 // pred_fallthru
          _
        %s357 = sand.u32 %s96, 1
        %s358 = scalar_lea.sflag [#allocation7], %s357
        %s359 = sand.u32 %s96, 1
        %s360 = smul.addr %s359, 2
        %s361 = scalar_lea.vmem [#allocation10], %s360
        // Predicated region
        $region45: #{tpu_custom_call.1} parent=27 // pred_check
          %p362 = pneg %p106
        $region46: #{tpu_custom_call.1} parent=27 // pred_check_branch
          %364 = sbr.rel (%p362) target = $region48
        $region47: #{tpu_custom_call.1} parent=27 // pred_region
          %s366 = ssub.s32 32, 32
          %367 = vsyncadd %s358, %s366
          %s368 = smul.addr %s26, 32
          %s369 = scalar_lea.hbm %s2, %s368
          %s371 = sshll.u32 %s361, 4
          %s372 = int_to_ptr.vmem [resolvable:$true] %s371
          %374 = dma.vmem_to_hbm [thread:$0]  %s372, 32, %s369, %s358
        $region48: #{tpu_custom_call.1} parent=27 // pred_fallthru
          _
      $region28: #{tpu_custom_call.1} parent=5 // pred_fallthru
        _
      %p375 = scmp.le.s32.totalorder 2, %s17
      // Predicated region
      $region49: #{tpu_custom_call.1} parent=5 // pred_check
        %p376 = pneg %p375
      $region50: #{tpu_custom_call.1} parent=5 // pred_check_branch
        %378 = sbr.rel (%p376) target = $region52
      $region51: #{tpu_custom_call.1} parent=5 // pred_region
        %s379 = ssub.s32 %s17, 2
        // Predicated region
        $region53: #{tpu_custom_call.1} parent=51 // pred_check
          %p380 = pneg %p112
        $region54: #{tpu_custom_call.1} parent=51 // pred_check_branch
          %382 = sbr.rel (%p380) target = $region56
        $region55: #{tpu_custom_call.1} parent=51 // pred_region
          %s383 = sand.u32 %s97, 1
          %s384 = scalar_lea.sflag [#allocation7], %s383
          %s385 = sand.u32 %s97, 1
          %s386 = smul.addr %s385, 2
          %s387 = scalar_lea.vmem [#allocation10], %s386
          %388 = dma.done %s384, 32
        $region56: #{tpu_custom_call.1} parent=51 // pred_fallthru
          _
      $region52: #{tpu_custom_call.1} parent=5 // pred_fallthru
        _
    $region6: #{tpu_custom_call.1} parent=1 // loop_footer
      %s21 = sadd.s32 1, %s17
    $region7: #{tpu_custom_call.1} parent=1 // loop_footer_branch
      %16 = sbr.rel target = $region3
    $region8: #{tpu_custom_call.1} parent=1 // loop_exit
      _
    %389 = vsyncpa [#allocation6], 1
    %s390 = scalar_lea.sflag [#allocation6], 1
    %391 = vsyncpa %s390, 1
    %392 = vsyncpa [#allocation9], 1
    %s393 = scalar_lea.sflag [#allocation9], 1
    %394 = vsyncpa %s393, 1
    %395 = vsyncpa [#allocation7], 1
    %s396 = scalar_lea.sflag [#allocation7], 1
    %397 = vsyncpa %s396, 1

</llo_original>
